<compile_context>
chip_gen: v6e
topology: v6e:2x2x1
jax: 0.10.0
libtpu: 0.0.40
codegen_flags: <defaults>
</compile_context>

<pallas_src>
import functools

import numpy as np

import jax
import jax.numpy as jnp
from jax.experimental import pallas as pl
from jax.experimental.pallas import tpu as pltpu


LANE = 128          # output feature dims padded to this (lane-dense stores)
SUBLANE_BF16 = 16   # bf16 sublane pack: contraction dim pad only
ROW_TILE = 512      # node-row tile
K_TILE = 512        # reduction tile over A_hat columns (one "block" column)


def _round_up(x, m):
    return ((x + m - 1) // m) * m


def _vmem_limit_bytes():
    """Generation-aware VMEM limit (v7x: 64 MiB physical, v5e/v6e: 128 MiB)."""
    cap = 64 * 1024 * 1024
    try:
        info = pltpu.get_tpu_info()
        cap = int(getattr(info, "vmem_capacity_bytes", cap))
    except Exception:
        pass
    return max(32 * 1024 * 1024, min(cap - 8 * 1024 * 1024, int(cap * 0.85)))


# -----------------------------------------------------------------------------
# Kernel 1: feature transform  XW = X @ W   (bf16 operands, f32 accumulate)
# -----------------------------------------------------------------------------
def feat_transform_kernel(x_ref, w_ref, o_ref):
    o_ref[...] = jnp.dot(
        x_ref[...], w_ref[...], preferred_element_type=jnp.float32
    ).astype(o_ref.dtype)


def feat_transform(x_bf16, w_bf16, *, row_tile, out_dtype=jnp.bfloat16):
    n, fin = x_bf16.shape
    fout = w_bf16.shape[1]
    flops = 2 * n * fin * fout
    bytes_accessed = (x_bf16.size * 2 + w_bf16.size * 2
                      + n * fout * jnp.dtype(out_dtype).itemsize)
    return pl.pallas_call(
        feat_transform_kernel,
        out_shape=jax.ShapeDtypeStruct((n, fout), out_dtype),
        grid_spec=pltpu.PrefetchScalarGridSpec(
            num_scalar_prefetch=0,
            grid=(n // row_tile,),
            in_specs=[
                pl.BlockSpec((row_tile, fin), lambda i: (i, 0)),
                pl.BlockSpec((fin, fout), lambda i: (0, 0)),   # W resident
            ],
            out_specs=pl.BlockSpec((row_tile, fout), lambda i: (i, 0)),
        ),
        compiler_params=pltpu.CompilerParams(
            dimension_semantics=("parallel",),
            vmem_limit_bytes=_vmem_limit_bytes(),
        ),
        cost_estimate=pl.CostEstimate(
            flops=int(flops), transcendentals=0,
            bytes_accessed=int(bytes_accessed)),
    )(x_bf16, w_bf16)


# -----------------------------------------------------------------------------
# Kernel 2: block-sparse aggregation  Out = A_hat @ M + b  (optional ReLU)
#   grid = (row tiles, max nonzero blocks per row tile)
#   scalar prefetch: per-row-tile nonzero-block counts + column-block ids
# -----------------------------------------------------------------------------
def aggregate_kernel(cnt_ref, ids_ref, a_ref, m_ref, b_ref, o_ref, acc_ref,
                     *, k_tile, resident_m, apply_relu):
    i = pl.program_id(0)
    k = pl.program_id(1)

    @pl.when(k == 0)
    def _init():
        # init accumulator with broadcast bias (saves a zero pass + epilogue add)
        acc_ref[...] = jnp.broadcast_to(
            b_ref[...], acc_ref.shape).astype(jnp.float32)

    @pl.when(k < cnt_ref[i])            # skip padded (empty) block steps
    def _accumulate():
        if resident_m:
            start = pl.multiple_of(ids_ref[i, k] * k_tile, k_tile)
            m_blk = m_ref[pl.ds(start, k_tile), :]
        else:
            m_blk = m_ref[...]
        acc_ref[...] += jnp.dot(a_ref[...], m_blk,
                                preferred_element_type=jnp.float32)

    @pl.when(k == pl.num_programs(1) - 1)
    def _writeback():
        out = acc_ref[...]
        if apply_relu:
            out = jnp.maximum(out, 0.0)
        o_ref[...] = out.astype(o_ref.dtype)


def aggregate(a_bf16, m_bf16, bias_f32, blk_cnt, blk_ids, *, row_tile, k_tile,
              apply_relu, out_dtype, nnz_blocks):
    n = a_bf16.shape[0]
    f = m_bf16.shape[1]
    nb_r = n // row_tile
    max_blk = blk_ids.shape[1]
    vmem_limit = _vmem_limit_bytes()

    # Keep M resident in VMEM if it (x2 buffering safety) plus streaming
    # buffers fit comfortably; otherwise K-stream gathered (k_tile, f) blocks.
    out_bytes = jnp.dtype(out_dtype).itemsize
    stream_bytes = (2 * row_tile * k_tile * 2        # A tile double buffer
                    + 2 * row_tile * f * out_bytes   # output double buffer
                    + row_tile * f * 4               # f32 accumulator
                    + f * 4)                         # bias
    resident_m = (2 * m_bf16.size * 2 + stream_bytes) <= int(0.7 * vmem_limit)

    if resident_m:
        m_spec = pl.BlockSpec((n, f), lambda i, k, cnt, ids: (0, 0))
    else:
        m_spec = pl.BlockSpec((k_tile, f), lambda i, k, cnt, ids: (ids[i, k], 0))

    m_bytes = m_bf16.size * 2 if resident_m else nnz_blocks * k_tile * f * 2
    bytes_accessed = (nnz_blocks * row_tile * k_tile * 2 + m_bytes
                      + f * 4 + n * f * out_bytes)
    flops = 2 * nnz_blocks * row_tile * k_tile * f

    return pl.pallas_call(
        functools.partial(aggregate_kernel, k_tile=k_tile,
                          resident_m=resident_m, apply_relu=apply_relu),
        out_shape=jax.ShapeDtypeStruct((n, f), out_dtype),
        grid_spec=pltpu.PrefetchScalarGridSpec(
            num_scalar_prefetch=2,
            grid=(nb_r, max_blk),
            in_specs=[
                pl.BlockSpec((row_tile, k_tile),
                             lambda i, k, cnt, ids: (i, ids[i, k])),
                m_spec,
                pl.BlockSpec((1, f), lambda i, k, cnt, ids: (0, 0)),
            ],
            out_specs=pl.BlockSpec((row_tile, f),
                                   lambda i, k, cnt, ids: (i, 0)),
            scratch_shapes=[pltpu.VMEM((row_tile, f), jnp.float32)],
        ),
        compiler_params=pltpu.CompilerParams(
            dimension_semantics=("parallel", "arbitrary"),
            vmem_limit_bytes=vmem_limit,
        ),
        cost_estimate=pl.CostEstimate(
            flops=int(flops), transcendentals=0,
            bytes_accessed=int(bytes_accessed)),
    )(blk_cnt, blk_ids, a_bf16, m_bf16, bias_f32)


# -----------------------------------------------------------------------------
# Glue: dense normalized adjacency (PyG gcn_norm), built straight into the
# padded buffer, plus host-side per-row-tile nonzero-block lists.
# -----------------------------------------------------------------------------
def normalized_adjacency_padded(edge_index, num_nodes, padded_nodes):
    row = edge_index[0]  # source nodes
    col = edge_index[1]  # target nodes
    loop = jnp.arange(num_nodes, dtype=edge_index.dtype)
    row = jnp.concatenate([row, loop])
    col = jnp.concatenate([col, loop])
    w = jnp.ones(row.shape[0], dtype=jnp.float32)

    deg = jnp.zeros((num_nodes,), jnp.float32).at[col].add(w)
    deg_inv_sqrt = jnp.where(deg > 0.0, 1.0 / jnp.sqrt(deg), 0.0)
    norm = deg_inv_sqrt[row] * deg_inv_sqrt[col]

    # message flows source (row) -> target (col): A_hat[target, source] = norm
    return jnp.zeros((padded_nodes, padded_nodes),
                     jnp.float32).at[col, row].add(norm)


def _block_lists(a_padded, row_tile, k_tile):
    """Per-row-tile lists of non-empty column blocks of a_padded (host-side)."""
    n_p = a_padded.shape[0]
    nb_r, nb_k = n_p // row_tile, n_p // k_tile
    occ = np.asarray(
        (a_padded.reshape(nb_r, row_tile, nb_k, k_tile) != 0.0).any(axis=(1, 3)))
    cnt = occ.sum(axis=1).astype(np.int32)
    max_blk = max(int(cnt.max()) if cnt.size else 1, 1)
    ids = np.zeros((nb_r, max_blk), np.int32)
    for r in range(nb_r):
        nz = np.nonzero(occ[r])[0].astype(np.int32)
        if nz.size == 0:
            nz = np.zeros((1,), np.int32)
        ids[r, :nz.size] = nz
        ids[r, nz.size:] = nz[-1]   # repeat last id -> duplicate DMA is elided
    return jnp.asarray(cnt), jnp.asarray(ids), int(cnt.sum())


# -----------------------------------------------------------------------------
# Full GCN encoder forward
# -----------------------------------------------------------------------------
def gcn_encoder(x, edge_index, w1, b1, w2, b2, *, row_tile=ROW_TILE,
                k_tile=K_TILE):
    n, fin = x.shape
    hid = w1.shape[1]
    fout = w2.shape[1]

    n_p = _round_up(n, max(row_tile, k_tile))
    fin_p = _round_up(fin, SUBLANE_BF16)   # contraction dim: sublane pad only
    hid_p = _round_up(hid, LANE)
    fout_p = _round_up(fout, LANE)

    a_p = normalized_adjacency_padded(edge_index, n, n_p)
    blk_cnt, blk_ids, nnz_blocks = _block_lists(a_p, row_tile, k_tile)
    a_bf = a_p.astype(jnp.bfloat16)

    # Zero padding: padded rows/cols of A_hat and padded feature cols are zero,
    # so the valid output block matches the unpadded computation exactly.
    x_p = jnp.zeros((n_p, fin_p), jnp.float32).at[:n, :fin].set(x)
    w1_p = jnp.zeros((fin_p, hid_p), jnp.float32).at[:fin, :hid].set(w1)
    b1_p = jnp.zeros((1, hid_p), jnp.float32).at[:, :hid].set(b1.reshape(1, -1))
    w2_p = jnp.zeros((hid_p, fout_p), jnp.float32).at[:hid, :fout].set(w2)
    b2_p = jnp.zeros((1, fout_p), jnp.float32).at[:, :fout].set(b2.reshape(1, -1))

    x_bf = x_p.astype(jnp.bfloat16)
    w1_bf = w1_p.astype(jnp.bfloat16)
    w2_bf = w2_p.astype(jnp.bfloat16)

    # ---- layer 1: H = relu(A_hat @ (X @ W1) + b1) ----
    xw1 = feat_transform(x_bf, w1_bf, row_tile=row_tile)
    h = aggregate(a_bf, xw1, b1_p, blk_cnt, blk_ids, row_tile=row_tile,
                  k_tile=k_tile, apply_relu=True, out_dtype=jnp.bfloat16,
                  nnz_blocks=nnz_blocks)

    # ---- layer 2: Z = A_hat @ (H @ W2) + b2 ----
    hw2 = feat_transform(h, w2_bf, row_tile=row_tile)
    z = aggregate(a_bf, hw2, b2_p, blk_cnt, blk_ids, row_tile=row_tile,
                  k_tile=k_tile, apply_relu=False, out_dtype=jnp.float32,
                  nnz_blocks=nnz_blocks)

    return z[:n, :fout]


# -----------------------------------------------------------------------------
# Pure-JAX references (bf16-matched and full f32)
# -----------------------------------------------------------------------------
def gcn_encoder_ref(a_hat, x, w1, b1, w2, b2, *, dot_dtype):
    def d(a, b):
        return jnp.dot(a.astype(dot_dtype), b.astype(dot_dtype),
                       preferred_element_type=jnp.float32)
    h = jnp.maximum(d(a_hat, d(x, w1)) + b1, 0.0)
    return d(a_hat, d(h, w2)) + b2


if __name__ == "__main__":
    key = jax.random.PRNGKey(0)

    num_nodes = 1536          # 3 row tiles of 512 -> exercises block skipping
    in_channels = 16
    out_channels = 8
    hidden = 2 * out_channels
    k_x, k_e1a, k_e1b, k_e2a, k_e2b, k_w1, k_w2 = jax.random.split(key, 7)

    x = jax.random.normal(k_x, (num_nodes, in_channels), dtype=jnp.float32)

    # Two communities: nodes [0, 1024) interconnect (row tiles 0/1), nodes
    # [1024, 1536) only connect among themselves (row tile 2), so the A_hat
    # blocks (0,2),(1,2),(2,0),(2,1) are empty and skipped by the sparse kernel.
    s1 = jax.random.randint(k_e1a, (1024,), 0, 1024)
    d1 = jax.random.randint(k_e1b, (1024,), 0, 1024)
    s2 = jax.random.randint(k_e2a, (512,), 1024, 1536)
    d2 = jax.random.randint(k_e2b, (512,), 1024, 1536)
    src = jnp.concatenate([s1, s2])
    dst = jnp.concatenate([d1, d2])
    edge_index = jnp.stack([jnp.concatenate([src, dst]),
                            jnp.concatenate([dst, src])],
                           axis=0).astype(jnp.int32)

    # deterministic glorot-like init for the two GCNConv layers
    sc1 = jnp.sqrt(6.0 / (in_channels + hidden))
    w1 = jax.random.uniform(k_w1, (in_channels, hidden), jnp.float32, -sc1, sc1)
    b1 = jnp.zeros((1, hidden), jnp.float32)
    sc2 = jnp.sqrt(6.0 / (hidden + out_channels))
    w2 = jax.random.uniform(k_w2, (hidden, out_channels), jnp.float32, -sc2, sc2)
    b2 = jnp.zeros((1, out_channels), jnp.float32)

    out = gcn_encoder(x, edge_index, w1, b1, w2, b2)
    out = jax.block_until_ready(out)
    assert out.shape == (num_nodes, out_channels)

    a_hat = normalized_adjacency_padded(edge_index, num_nodes, num_nodes)
    ref_bf16 = gcn_encoder_ref(a_hat, x, w1, b1, w2, b2, dot_dtype=jnp.bfloat16)
    ref_f32 = gcn_encoder_ref(a_hat, x, w1, b1, w2, b2, dot_dtype=jnp.float32)

    assert jnp.allclose(out, ref_bf16, atol=2e-2, rtol=2e-2), \
        "mismatch vs bf16-matched reference"
    assert jnp.allclose(out, ref_f32, atol=1e-1, rtol=1e-1), \
        "mismatch vs f32 reference"

    print("KERNEL_OK")
</pallas_src>

<mosaic_0001>
module attributes {stable_mosaic.version = 11 : i64} {
  func.func @feat_transform_kernel(%arg0: i32, %arg1: memref<512x16xbf16, #tpu.memory_space<vmem>>, %arg2: memref<16x128xbf16, #tpu.memory_space<vmem>>, %arg3: memref<512x128xbf16, #tpu.memory_space<vmem>>) attributes {dimension_semantics = [#tpu.dimension_semantics<parallel>], iteration_bounds = array<i64: 3>, scalar_prefetch = 0 : i64, scratch_operands = 0 : i64, tpu.core_type = #tpu.core_type<tc>, window_params = [{transform_indices = @transform_0, window_bounds = array<i64: 512, 16>}, {pipeline_mode = #tpu.pipeline_mode<synchronous>, transform_indices = @transform_1, window_bounds = array<i64: 16, 128>}, {transform_indices = @transform_2, window_bounds = array<i64: 512, 128>}]} {
    %c0 = arith.constant 0 : index
    %c0_0 = arith.constant 0 : index
    %0 = vector.load %arg1[%c0, %c0_0] : memref<512x16xbf16, #tpu.memory_space<vmem>>, vector<512x16xbf16>
    %c0_1 = arith.constant 0 : index
    %c0_2 = arith.constant 0 : index
    %1 = vector.load %arg2[%c0_1, %c0_2] : memref<16x128xbf16, #tpu.memory_space<vmem>>, vector<16x128xbf16>
    %cst = arith.constant dense<0.000000e+00> : vector<512x128xf32>
    %2 = tpu.matmul %0, %1, %cst {dimension_numbers = #tpu.dot_dimension_numbers<[1], [0], [0], [1], [0, 0, 1, 1], [], []>} : vector<512x16xbf16>, vector<16x128xbf16>, vector<512x128xf32> -> vector<512x128xf32>
    %3 = arith.truncf %2 : vector<512x128xf32> to vector<512x128xbf16>
    %c0_3 = arith.constant 0 : index
    %c0_4 = arith.constant 0 : index
    %4 = vector.load %arg3[%c0_3, %c0_4] : memref<512x128xbf16, #tpu.memory_space<vmem>>, vector<512x128xbf16>
    tpu.vector_store %arg3[%c0_3, %c0_4], %3 {strides = array<i32>} : memref<512x128xbf16, #tpu.memory_space<vmem>>, vector<512x128xbf16>,
    return
  }
  func.func @transform_0(%arg0: i32) -> (i32, i32) {
    %c0_i32 = arith.constant 0 : i32
    %c0_i32_0 = arith.constant 0 : i32
    return %arg0, %c0_i32 : i32, i32
  }
  func.func @transform_1(%arg0: i32) -> (i32, i32) {
    %c0_i32 = arith.constant 0 : i32
    %c0_i32_0 = arith.constant 0 : i32
    %c0_i32_1 = arith.constant 0 : i32
    return %c0_i32, %c0_i32_0 : i32, i32
  }
  func.func @transform_2(%arg0: i32) -> (i32, i32) {
    %c0_i32 = arith.constant 0 : i32
    %c0_i32_0 = arith.constant 0 : i32
    return %arg0, %c0_i32 : i32, i32
  }
}

</mosaic_0001>

<llo_original>
// kernel: tpu_custom_call.1
$region0: #{tpu_custom_call.1}
  #allocation0 [shape = 'u32[]', space=smem, size = 0x4, offset = 0x4, fixed_abs, tag = 'smem constant byte address 0x4 - core index']
  #allocation1 [shape = 'u32[144,128]{1,0:T(1,128)}', space=vmem, size = 0x12000, scoped, tag = 'internal scratch']
  %s0 = inlined_call_operand.vmem [shape: bf16[1536,16], index: 0, kind: input, shape index: {}]
  %s1 = inlined_call_operand.vmem [shape: bf16[16,128], index: 1, kind: input, shape index: {}]
  %s2 = inlined_call_operand.hbm [shape: bf16[1536,128], index: 2, kind: output, shape index: {}]
  %s3 = sld [smem:[#allocation0]]
  $region41: #{tpu_custom_call.1} parent=0
    _
  %s5 = ssub.s32 1, %s3
  %s6 = scalar_select 0, %s5, %s3
  $region1: #{tpu_custom_call.1} parent=0
    #allocation2 [shape = 'u8[262144]{0}', space=vmem, size = 0x40000, scoped, tag = 'output window, operand 0']
    #allocation3 [shape = 's32[2]{0}', space=sflag, size = 0x8, scoped, tag = 'scoped memory for tpu_custom_call.1']
    %7 = vsyncpa [#allocation3], 0
    %s8 = scalar_lea.sflag [#allocation3], 1
    %9 = vsyncpa %s8, 0
    loop: start=0, step=1, limit=5
    $region2: #{tpu_custom_call.1} parent=1 // loop_pre_header
      _
    $region3: #{tpu_custom_call.1} parent=1 // loop_header
      %s11 = sphi 0, %s15
      %p12 = scmp.ge.s32.totalorder %s11, 5
      %s21 = sphi 0, %s23
      %s24 = sphi 0, %s21
      %s25 = sphi 0, %s24
      %s41 = sphi 0, %s25
      %s45 = sphi 0, %s45
      %s47 = sphi 0, %s45
      %s48 = sphi 0, %s47
      %s62 = sphi 0, %s48
      %s68 = sphi 0, %s70
      %s71 = sphi 0, %s68
      %s72 = sphi 0, %s71
      %s88 = sphi 0, %s72
    $region4: #{tpu_custom_call.1} parent=1 // loop_header_branch
      %14 = sbr.rel (%p12) target = $region8
    $region5: #{tpu_custom_call.1} parent=1 // loop_body
      %s16 = ssub.s32 %s11, 1
      %s17 = ssub.s32 %s11, 2
      %s18 = sadd.s32 %s11, 1
      %s19 = ssub.s32 %s11, %s18
      %p20 = scmp.eq.s32.totalorder %s19, 0
      %s22 = sadd.s32 %s21, 1
      %s23 = scalar_select %p20, %s21, %s22
      %p26 = pneg %p20
      %p27 = scmp.eq.s32.totalorder %s11, 2
      %p28 = por %p26, %p27
      %p29 = scmp.ne.s32.totalorder %s21, %s24
      %p30 = scmp.eq.s32.totalorder %s11, 0
      %p31 = por %p29, %p30
      %p32 = scmp.ne.s32.totalorder %s21, %s24
      %p33 = scmp.eq.s32.totalorder %s16, 2
      %p34 = por %p32, %p33
      %p35 = scmp.ne.s32.totalorder %s24, %s25
      %p36 = scmp.eq.s32.totalorder %s16, 0
      %p37 = por %p35, %p36
      %p38 = scmp.ne.s32.totalorder %s24, %s25
      %p39 = scmp.eq.s32.totalorder %s17, 2
      %p40 = por %p38, %p39
      %p42 = scmp.ne.s32.totalorder %s25, %s41
      %p43 = scmp.eq.s32.totalorder %s17, 0
      %p44 = por %p42, %p43
      %s46 = sadd.s32 %s45, 1
      %p49 = scmp.eq.s32.totalorder %s11, 2
      %p50 = scmp.ne.s32.totalorder %s45, %s47
      %p51 = scmp.eq.s32.totalorder %s11, 0
      %p52 = por %p50, %p51
      %p53 = scmp.ne.s32.totalorder %s45, %s47
      %p54 = scmp.eq.s32.totalorder %s16, 2
      %p55 = por %p53, %p54
      %p56 = scmp.ne.s32.totalorder %s47, %s48
      %p57 = scmp.eq.s32.totalorder %s16, 0
      %p58 = por %p56, %p57
      %p59 = scmp.ne.s32.totalorder %s47, %s48
      %p60 = scmp.eq.s32.totalorder %s17, 2
      %p61 = por %p59, %p60
      %p63 = scmp.ne.s32.totalorder %s48, %s62
      %p64 = scmp.eq.s32.totalorder %s17, 0
      %p65 = por %p63, %p64
      %s66 = ssub.s32 %s11, %s18
      %p67 = scmp.eq.s32.totalorder %s66, 0
      %s69 = sadd.s32 %s68, 1
      %s70 = scalar_select %p67, %s68, %s69
      %p73 = pneg %p67
      %p74 = scmp.eq.s32.totalorder %s11, 2
      %p75 = por %p73, %p74
      %p76 = scmp.ne.s32.totalorder %s68, %s71
      %p77 = scmp.eq.s32.totalorder %s11, 0
      %p78 = por %p76, %p77
      %p79 = scmp.ne.s32.totalorder %s68, %s71
      %p80 = scmp.eq.s32.totalorder %s16, 2
      %p81 = por %p79, %p80
      %p82 = scmp.ne.s32.totalorder %s71, %s72
      %p83 = scmp.eq.s32.totalorder %s16, 0
      %p84 = por %p82, %p83
      %p85 = scmp.ne.s32.totalorder %s71, %s72
      %p86 = scmp.eq.s32.totalorder %s17, 2
      %p87 = por %p85, %p86
      %p89 = scmp.ne.s32.totalorder %s72, %s88
      %p90 = scmp.eq.s32.totalorder %s17, 0
      %p91 = por %p89, %p90
      %p92 = scmp.le.s32.totalorder 1, %s11
      %p93 = scmp.lt.s32.totalorder %s11, 4
      %p94 = pnand %p92, %p93
      %p95 = pneg %p94
      // Predicated region
      $region9: #{tpu_custom_call.1} parent=5 // pred_check
        _
      $region10: #{tpu_custom_call.1} parent=5 // pred_check_branch
        %97 = sbr.rel (%p94) target = $region12
      $region11: #{tpu_custom_call.1} parent=5 // pred_region
        %s98 = ssub.s32 %s11, 1
        // Predicated region
        $region13: #{tpu_custom_call.1} parent=11 // pred_check
          %p99 = pneg %p58
        $region14: #{tpu_custom_call.1} parent=11 // pred_check_branch
          %101 = sbr.rel (%p99) target = $region16
        $region15: #{tpu_custom_call.1} parent=11 // pred_region
          _
        $region16: #{tpu_custom_call.1} parent=11 // pred_fallthru
          _
      $region12: #{tpu_custom_call.1} parent=5 // pred_fallthru
        _
      %p102 = scmp.lt.s32.totalorder %s11, 3
      // Predicated region
      $region17: #{tpu_custom_call.1} parent=5 // pred_check
        %p103 = pneg %p102
      $region18: #{tpu_custom_call.1} parent=5 // pred_check_branch
        %105 = sbr.rel (%p103) target = $region20
      $region19: #{tpu_custom_call.1} parent=5 // pred_region
        // Predicated region
        $region21: #{tpu_custom_call.1} parent=19 // pred_check
          %p106 = pneg %p31
        $region22: #{tpu_custom_call.1} parent=19 // pred_check_branch
          %108 = sbr.rel (%p106) target = $region24
        $region23: #{tpu_custom_call.1} parent=19 // pred_region
          %s109 = smul.u32 64, %s11
          %p110 = scmp.lt.s32.totalorder %s109, 191
          %s111 = scalar_select %p110, %s109, 191
          %s112 = smul.addr %s111, 4
          %s113 = scalar_lea.vmem %s0, %s112
          %s114 = smul.u32 64, %s11
        $region24: #{tpu_custom_call.1} parent=19 // pred_fallthru
          _
      $region20: #{tpu_custom_call.1} parent=5 // pred_fallthru
        _
      %p115 = scmp.le.s32.totalorder 1, %s11
      %p116 = scmp.lt.s32.totalorder %s11, 4
      %p117 = pnand %p115, %p116
      %p118 = pneg %p117
      // Predicated region
      $region25: #{tpu_custom_call.1} parent=5 // pred_check
        _
      $region26: #{tpu_custom_call.1} parent=5 // pred_check_branch
        %120 = sbr.rel (%p117) target = $region28
      $region27: #{tpu_custom_call.1} parent=5 // pred_region
        %s121 = ssub.s32 %s11, 1
        %s122 = smul.u32 64, %s16
        %p123 = scmp.lt.s32.totalorder %s122, 191
        %s124 = scalar_select %p123, %s122, 191
        %s125 = smul.addr %s124, 4
        %s126 = scalar_lea.vmem %s0, %s125
        %p127 = pneg %p37
        %p128 = pneg %p34
        %p129 = pneg %p58
        %p130 = pneg %p55
        %p131 = pneg %p84
        %p132 = pneg %p81
        %s133 = sand.u32 %s71, 1
        %s134 = scalar_lea.sflag [#allocation3], %s133
        %s135 = sand.u32 %s71, 1
        %s136 = smul.addr %s135, 256
        %s137 = scalar_lea.vmem [#allocation2], %s136
        %s138 = smul.u32 64, %s16
        %p139 = scmp.lt.s32.totalorder %s138, 191
        %s140 = scalar_select %p139, %s138, 191
        %s141 = smul.addr %s140, 4
        %s142 = scalar_lea.vmem %s0, %s141
        %s143 = smul.u32 64, %s16
        %s144 = smul.u32 64, %s16
        %v146 = vld [vmem:[%s142] sm:$0xf]
        %v147 = vld [vmem:[%s142 + $0x4] sm:$0xf]
        %v148 = vld [vmem:[%s142 + $0x8] sm:$0xf]
        %v149 = vld [vmem:[%s142 + $0xc] sm:$0xf]
        %v150 = vld [vmem:[%s142 + $0x10] sm:$0xf]
        %v151 = vld [vmem:[%s142 + $0x14] sm:$0xf]
        %v152 = vld [vmem:[%s142 + $0x18] sm:$0xf]
        %v153 = vld [vmem:[%s142 + $0x1c] sm:$0xf]
        %v154 = vld [vmem:[%s142 + $0x20] sm:$0xf]
        %v155 = vld [vmem:[%s142 + $0x24] sm:$0xf]
        %v156 = vld [vmem:[%s142 + $0x28] sm:$0xf]
        %v157 = vld [vmem:[%s142 + $0x2c] sm:$0xf]
        %v158 = vld [vmem:[%s142 + $0x30] sm:$0xf]
        %v159 = vld [vmem:[%s142 + $0x34] sm:$0xf]
        %v160 = vld [vmem:[%s142 + $0x38] sm:$0xf]
        %v161 = vld [vmem:[%s142 + $0x3c] sm:$0xf]
        %v162 = vld [vmem:[%s142 + $0x40] sm:$0xf]
        %v163 = vld [vmem:[%s142 + $0x44] sm:$0xf]
        %v164 = vld [vmem:[%s142 + $0x48] sm:$0xf]
        %v165 = vld [vmem:[%s142 + $0x4c] sm:$0xf]
        %v166 = vld [vmem:[%s142 + $0x50] sm:$0xf]
        %v167 = vld [vmem:[%s142 + $0x54] sm:$0xf]
        %v168 = vld [vmem:[%s142 + $0x58] sm:$0xf]
        %v169 = vld [vmem:[%s142 + $0x5c] sm:$0xf]
        %v170 = vld [vmem:[%s142 + $0x60] sm:$0xf]
        %v171 = vld [vmem:[%s142 + $0x64] sm:$0xf]
        %v172 = vld [vmem:[%s142 + $0x68] sm:$0xf]
        %v173 = vld [vmem:[%s142 + $0x6c] sm:$0xf]
        %v174 = vld [vmem:[%s142 + $0x70] sm:$0xf]
        %v175 = vld [vmem:[%s142 + $0x74] sm:$0xf]
        %v176 = vld [vmem:[%s142 + $0x78] sm:$0xf]
        %v177 = vld [vmem:[%s142 + $0x7c] sm:$0xf]
        %v178 = vld [vmem:[%s142 + $0x80] sm:$0xf]
        %v179 = vld [vmem:[%s142 + $0x84] sm:$0xf]
        %v180 = vld [vmem:[%s142 + $0x88] sm:$0xf]
        %v181 = vld [vmem:[%s142 + $0x8c] sm:$0xf]
        %v182 = vld [vmem:[%s142 + $0x90] sm:$0xf]
        %v183 = vld [vmem:[%s142 + $0x94] sm:$0xf]
        %v184 = vld [vmem:[%s142 + $0x98] sm:$0xf]
        %v185 = vld [vmem:[%s142 + $0x9c] sm:$0xf]
        %v186 = vld [vmem:[%s142 + $0xa0] sm:$0xf]
        %v187 = vld [vmem:[%s142 + $0xa4] sm:$0xf]
        %v188 = vld [vmem:[%s142 + $0xa8] sm:$0xf]
        %v189 = vld [vmem:[%s142 + $0xac] sm:$0xf]
        %v190 = vld [vmem:[%s142 + $0xb0] sm:$0xf]
        %v191 = vld [vmem:[%s142 + $0xb4] sm:$0xf]
        %v192 = vld [vmem:[%s142 + $0xb8] sm:$0xf]
        %v193 = vld [vmem:[%s142 + $0xbc] sm:$0xf]
        %v194 = vld [vmem:[%s142 + $0xc0] sm:$0xf]
        %v195 = vld [vmem:[%s142 + $0xc4] sm:$0xf]
        %v196 = vld [vmem:[%s142 + $0xc8] sm:$0xf]
        %v197 = vld [vmem:[%s142 + $0xcc] sm:$0xf]
        %v198 = vld [vmem:[%s142 + $0xd0] sm:$0xf]
        %v199 = vld [vmem:[%s142 + $0xd4] sm:$0xf]
        %v200 = vld [vmem:[%s142 + $0xd8] sm:$0xf]
        %v201 = vld [vmem:[%s142 + $0xdc] sm:$0xf]
        %v202 = vld [vmem:[%s142 + $0xe0] sm:$0xf]
        %v203 = vld [vmem:[%s142 + $0xe4] sm:$0xf]
        %v204 = vld [vmem:[%s142 + $0xe8] sm:$0xf]
        %v205 = vld [vmem:[%s142 + $0xec] sm:$0xf]
        %v206 = vld [vmem:[%s142 + $0xf0] sm:$0xf]
        %v207 = vld [vmem:[%s142 + $0xf4] sm:$0xf]
        %v208 = vld [vmem:[%s142 + $0xf8] sm:$0xf]
        %v209 = vld [vmem:[%s142 + $0xfc] sm:$0xf]
        %v210 = vld [vmem:[%s1] sm:$0xf]
        %v211 = vld [vmem:[%s1 + $0x4] sm:$0xf]
        %v276 = vunpack.c.l.b16 %v146
        %v277 = vunpack.c.l.b16 %v147
        %v278 = vunpack.c.l.b16 %v148
        %v279 = vunpack.c.l.b16 %v149
        %v280 = vunpack.c.l.b16 %v150
        %v281 = vunpack.c.l.b16 %v151
        %v282 = vunpack.c.l.b16 %v152
        %v283 = vunpack.c.l.b16 %v153
        %v284 = vunpack.c.l.b16 %v154
        %v285 = vunpack.c.l.b16 %v155
        %v286 = vunpack.c.l.b16 %v156
        %v287 = vunpack.c.l.b16 %v157
        %v288 = vunpack.c.l.b16 %v158
        %v289 = vunpack.c.l.b16 %v159
        %v290 = vunpack.c.l.b16 %v160
        %v291 = vunpack.c.l.b16 %v161
        %v292 = vunpack.c.l.b16 %v162
        %v293 = vunpack.c.l.b16 %v163
        %v294 = vunpack.c.l.b16 %v164
        %v295 = vunpack.c.l.b16 %v165
        %v296 = vunpack.c.l.b16 %v166
        %v297 = vunpack.c.l.b16 %v167
        %v298 = vunpack.c.l.b16 %v168
        %v299 = vunpack.c.l.b16 %v169
        %v300 = vunpack.c.l.b16 %v170
        %v301 = vunpack.c.l.b16 %v171
        %v302 = vunpack.c.l.b16 %v172
        %v303 = vunpack.c.l.b16 %v173
        %v304 = vunpack.c.l.b16 %v174
        %v305 = vunpack.c.l.b16 %v175
        %v306 = vunpack.c.l.b16 %v176
        %v307 = vunpack.c.l.b16 %v177
        %v308 = vunpack.c.l.b16 %v178
        %v309 = vunpack.c.l.b16 %v179
        %v310 = vunpack.c.l.b16 %v180
        %v311 = vunpack.c.l.b16 %v181
        %v312 = vunpack.c.l.b16 %v182
        %v313 = vunpack.c.l.b16 %v183
        %v314 = vunpack.c.l.b16 %v184
        %v315 = vunpack.c.l.b16 %v185
        %v316 = vunpack.c.l.b16 %v186
        %v317 = vunpack.c.l.b16 %v187
        %v318 = vunpack.c.l.b16 %v188
        %v319 = vunpack.c.l.b16 %v189
        %v320 = vunpack.c.l.b16 %v190
        %v321 = vunpack.c.l.b16 %v191
        %v322 = vunpack.c.l.b16 %v192
        %v323 = vunpack.c.l.b16 %v193
        %v324 = vunpack.c.l.b16 %v194
        %v325 = vunpack.c.l.b16 %v195
        %v326 = vunpack.c.l.b16 %v196
        %v327 = vunpack.c.l.b16 %v197
        %v328 = vunpack.c.l.b16 %v198
        %v329 = vunpack.c.l.b16 %v199
        %v330 = vunpack.c.l.b16 %v200
        %v331 = vunpack.c.l.b16 %v201
        %v332 = vunpack.c.l.b16 %v202
        %v333 = vunpack.c.l.b16 %v203
        %v334 = vunpack.c.l.b16 %v204
        %v335 = vunpack.c.l.b16 %v205
        %v336 = vunpack.c.l.b16 %v206
        %v337 = vunpack.c.l.b16 %v207
        %v338 = vunpack.c.l.b16 %v208
        %v339 = vunpack.c.l.b16 %v209
        %v340 = vpack.c.b16 %v277, %v276
        %v341 = vpack.c.b16 %v279, %v278
        %v342 = vpack.c.b16 %v281, %v280
        %v343 = vpack.c.b16 %v283, %v282
        %v344 = vpack.c.b16 %v285, %v284
        %v345 = vpack.c.b16 %v287, %v286
        %v346 = vpack.c.b16 %v289, %v288
        %v347 = vpack.c.b16 %v291, %v290
        %v348 = vpack.c.b16 %v293, %v292
        %v349 = vpack.c.b16 %v295, %v294
        %v350 = vpack.c.b16 %v297, %v296
        %v351 = vpack.c.b16 %v299, %v298
        %v352 = vpack.c.b16 %v301, %v300
        %v353 = vpack.c.b16 %v303, %v302
        %v354 = vpack.c.b16 %v305, %v304
        %v355 = vpack.c.b16 %v307, %v306
        %v356 = vpack.c.b16 %v309, %v308
        %v357 = vpack.c.b16 %v311, %v310
        %v358 = vpack.c.b16 %v313, %v312
        %v359 = vpack.c.b16 %v315, %v314
        %v360 = vpack.c.b16 %v317, %v316
        %v361 = vpack.c.b16 %v319, %v318
        %v362 = vpack.c.b16 %v321, %v320
        %v363 = vpack.c.b16 %v323, %v322
        %v364 = vpack.c.b16 %v325, %v324
        %v365 = vpack.c.b16 %v327, %v326
        %v366 = vpack.c.b16 %v329, %v328
        %v367 = vpack.c.b16 %v331, %v330
        %v368 = vpack.c.b16 %v333, %v332
        %v369 = vpack.c.b16 %v335, %v334
        %v370 = vpack.c.b16 %v337, %v336
        %v371 = vpack.c.b16 %v339, %v338
        %v374 = vunpack.c.l.b16 %v210
        %v375 = vunpack.c.l.b16 %v211
        %v376 = vpack.c.b16 %v375, %v374
        %vm378 = vcmask 130048
        %v380 = vsel %vm378, %v340, 0
        %v383 = vsel %vm378, %v341, 0
        %v386 = vsel %vm378, %v342, 0
        %v389 = vsel %vm378, %v343, 0
        %v392 = vsel %vm378, %v344, 0
        %v395 = vsel %vm378, %v345, 0
        %v398 = vsel %vm378, %v346, 0
        %v401 = vsel %vm378, %v347, 0
        %v404 = vsel %vm378, %v348, 0
        %v407 = vsel %vm378, %v349, 0
        %v410 = vsel %vm378, %v350, 0
        %v413 = vsel %vm378, %v351, 0
        %v416 = vsel %vm378, %v352, 0
        %v419 = vsel %vm378, %v353, 0
        %v422 = vsel %vm378, %v354, 0
        %v425 = vsel %vm378, %v355, 0
        %v428 = vsel %vm378, %v356, 0
        %v431 = vsel %vm378, %v357, 0
        %v434 = vsel %vm378, %v358, 0
        %v437 = vsel %vm378, %v359, 0
        %v440 = vsel %vm378, %v360, 0
        %v443 = vsel %vm378, %v361, 0
        %v446 = vsel %vm378, %v362, 0
        %v449 = vsel %vm378, %v363, 0
        %v452 = vsel %vm378, %v364, 0
        %v455 = vsel %vm378, %v365, 0
        %v458 = vsel %vm378, %v366, 0
        %v461 = vsel %vm378, %v367, 0
        %v464 = vsel %vm378, %v368, 0
        %v467 = vsel %vm378, %v369, 0
        %v470 = vsel %vm378, %v370, 0
        %v473 = vsel %vm378, %v371, 0
        %475 = vmatprep.subr.bf16.mxu0 0
        %476 = vmatpush1.bf16.msra.mxu0 0
        %477 = vmatprep.subr.bf16.mxu0 0
        %478 = vmatpush1.bf16.msra.mxu0 0
        %479 = vmatprep.subr.bf16.mxu0 0
        %480 = vmatpush1.bf16.msra.mxu0 0
        %481 = vmatprep.subr.bf16.mxu0 0
        %482 = vmatpush1.bf16.msra.mxu0 0
        %483 = vmatprep.subr.bf16.mxu0 0
        %484 = vmatpush1.bf16.msra.mxu0 0
        %485 = vmatprep.subr.bf16.mxu0 0
        %486 = vmatpush1.bf16.msra.mxu0 0
        %487 = vmatprep.subr.bf16.mxu0 0
        %488 = vmatpush1.bf16.msra.mxu0 0
        %489 = vmatprep.subr.bf16.mxu0 0
        %490 = vmatpush1.bf16.msra.mxu0 %v376
        %491 = vmatprep.subr.bf16.mxu0 0
        %492 = vmatpush2.bf16.msra.mxu0 0
        %493 = vmatprep.subr.bf16.mxu0 0
        %494 = vmatpush2.bf16.msra.mxu0 0
        %495 = vmatprep.subr.bf16.mxu0 0
        %496 = vmatpush2.bf16.msra.mxu0 0
        %497 = vmatprep.subr.bf16.mxu0 0
        %498 = vmatpush2.bf16.msra.mxu0 0
        %499 = vmatprep.subr.bf16.mxu0 0
        %500 = vmatpush2.bf16.msra.mxu0 0
        %501 = vmatprep.subr.bf16.mxu0 0
        %502 = vmatpush2.bf16.msra.mxu0 0
        %503 = vmatprep.subr.bf16.mxu0 0
        %504 = vmatpush2.bf16.msra.mxu0 0
        %505 = vmatprep.subr.bf16.mxu0 0
        %506 = vmatpush2.bf16.msra.mxu0 0
        %507 = vmatprep.mubr.bf16.mxu0 0
        %508 = vmatmul.mubr.bf16.gmra.mxu0 %v380
        %v509 = vpop.f32.mrf.mxu0
        %v510 = vadd.f32 0.0, %v509
        %v511 = vpop.f32.mrf.mxu0
        %v512 = vpop.f32.mrf.mxu0
        %v513 = vadd.f32 0.0, %v512
        %v514 = vpop.f32.mrf.mxu0
        %515 = vmatprep.mubr.bf16.mxu0 0
        %516 = vmatmul.mubr.bf16.gmra.mxu0 %v383
        %v517 = vpop.f32.mrf.mxu0
        %v518 = vadd.f32 0.0, %v517
        %v519 = vpop.f32.mrf.mxu0
        %v520 = vpop.f32.mrf.mxu0
        %v521 = vadd.f32 0.0, %v520
        %v522 = vpop.f32.mrf.mxu0
        %523 = vmatprep.mubr.bf16.mxu0 0
        %524 = vmatmul.mubr.bf16.gmra.mxu0 %v386
        %v525 = vpop.f32.mrf.mxu0
        %v526 = vadd.f32 0.0, %v525
        %v527 = vpop.f32.mrf.mxu0
        %v528 = vpop.f32.mrf.mxu0
        %v529 = vadd.f32 0.0, %v528
        %v530 = vpop.f32.mrf.mxu0
        %531 = vmatprep.mubr.bf16.mxu0 0
        %532 = vmatmul.mubr.bf16.gmra.mxu0 %v389
        %v533 = vpop.f32.mrf.mxu0
        %v534 = vadd.f32 0.0, %v533
        %v535 = vpop.f32.mrf.mxu0
        %v536 = vpop.f32.mrf.mxu0
        %v537 = vadd.f32 0.0, %v536
        %v538 = vpop.f32.mrf.mxu0
        %539 = vmatprep.mubr.bf16.mxu0 0
        %540 = vmatmul.mubr.bf16.gmra.mxu0 %v392
        %v541 = vpop.f32.mrf.mxu0
        %v542 = vadd.f32 0.0, %v541
        %v543 = vpop.f32.mrf.mxu0
        %v544 = vpop.f32.mrf.mxu0
        %v545 = vadd.f32 0.0, %v544
        %v546 = vpop.f32.mrf.mxu0
        %547 = vmatprep.mubr.bf16.mxu0 0
        %548 = vmatmul.mubr.bf16.gmra.mxu0 %v395
        %v549 = vpop.f32.mrf.mxu0
        %v550 = vadd.f32 0.0, %v549
        %v551 = vpop.f32.mrf.mxu0
        %v552 = vpop.f32.mrf.mxu0
        %v553 = vadd.f32 0.0, %v552
        %v554 = vpop.f32.mrf.mxu0
        %555 = vmatprep.mubr.bf16.mxu0 0
        %556 = vmatmul.mubr.bf16.gmra.mxu0 %v398
        %v557 = vpop.f32.mrf.mxu0
        %v558 = vadd.f32 0.0, %v557
        %v559 = vpop.f32.mrf.mxu0
        %v560 = vpop.f32.mrf.mxu0
        %v561 = vadd.f32 0.0, %v560
        %v562 = vpop.f32.mrf.mxu0
        %563 = vmatprep.mubr.bf16.mxu0 0
        %564 = vmatmul.mubr.bf16.gmra.mxu0 %v401
        %v565 = vpop.f32.mrf.mxu0
        %v566 = vadd.f32 0.0, %v565
        %v567 = vpop.f32.mrf.mxu0
        %v568 = vpop.f32.mrf.mxu0
        %v569 = vadd.f32 0.0, %v568
        %v570 = vpop.f32.mrf.mxu0
        %571 = vmatprep.mubr.bf16.mxu0 0
        %572 = vmatmul.mubr.bf16.gmra.mxu0 %v404
        %v573 = vpop.f32.mrf.mxu0
        %v574 = vadd.f32 0.0, %v573
        %v575 = vpop.f32.mrf.mxu0
        %v576 = vpop.f32.mrf.mxu0
        %v577 = vadd.f32 0.0, %v576
        %v578 = vpop.f32.mrf.mxu0
        %579 = vmatprep.mubr.bf16.mxu0 0
        %580 = vmatmul.mubr.bf16.gmra.mxu0 %v407
        %v581 = vpop.f32.mrf.mxu0
        %v582 = vadd.f32 0.0, %v581
        %v583 = vpop.f32.mrf.mxu0
        %v584 = vpop.f32.mrf.mxu0
        %v585 = vadd.f32 0.0, %v584
        %v586 = vpop.f32.mrf.mxu0
        %587 = vmatprep.mubr.bf16.mxu0 0
        %588 = vmatmul.mubr.bf16.gmra.mxu0 %v410
        %v589 = vpop.f32.mrf.mxu0
        %v590 = vadd.f32 0.0, %v589
        %v591 = vpop.f32.mrf.mxu0
        %v592 = vpop.f32.mrf.mxu0
        %v593 = vadd.f32 0.0, %v592
        %v594 = vpop.f32.mrf.mxu0
        %595 = vmatprep.mubr.bf16.mxu0 0
        %596 = vmatmul.mubr.bf16.gmra.mxu0 %v413
        %v597 = vpop.f32.mrf.mxu0
        %v598 = vadd.f32 0.0, %v597
        %v599 = vpop.f32.mrf.mxu0
        %v600 = vpop.f32.mrf.mxu0
        %v601 = vadd.f32 0.0, %v600
        %v602 = vpop.f32.mrf.mxu0
        %603 = vmatprep.mubr.bf16.mxu0 0
        %604 = vmatmul.mubr.bf16.gmra.mxu0 %v416
        %v605 = vpop.f32.mrf.mxu0
        %v606 = vadd.f32 0.0, %v605
        %v607 = vpop.f32.mrf.mxu0
        %v608 = vpop.f32.mrf.mxu0
        %v609 = vadd.f32 0.0, %v608
        %v610 = vpop.f32.mrf.mxu0
        %611 = vmatprep.mubr.bf16.mxu0 0
        %612 = vmatmul.mubr.bf16.gmra.mxu0 %v419
        %v613 = vpop.f32.mrf.mxu0
        %v614 = vadd.f32 0.0, %v613
        %v615 = vpop.f32.mrf.mxu0
        %v616 = vpop.f32.mrf.mxu0
        %v617 = vadd.f32 0.0, %v616
        %v618 = vpop.f32.mrf.mxu0
        %619 = vmatprep.mubr.bf16.mxu0 0
        %620 = vmatmul.mubr.bf16.gmra.mxu0 %v422
        %v621 = vpop.f32.mrf.mxu0
        %v622 = vadd.f32 0.0, %v621
        %v623 = vpop.f32.mrf.mxu0
        %v624 = vpop.f32.mrf.mxu0
        %v625 = vadd.f32 0.0, %v624
        %v626 = vpop.f32.mrf.mxu0
        %627 = vmatprep.mubr.bf16.mxu0 0
        %628 = vmatmul.mubr.bf16.gmra.mxu0 %v425
        %v629 = vpop.f32.mrf.mxu0
        %v630 = vadd.f32 0.0, %v629
        %v631 = vpop.f32.mrf.mxu0
        %v632 = vpop.f32.mrf.mxu0
        %v633 = vadd.f32 0.0, %v632
        %v634 = vpop.f32.mrf.mxu0
        %635 = vmatprep.mubr.bf16.mxu0 0
        %636 = vmatmul.mubr.bf16.gmra.mxu0 %v428
        %v637 = vpop.f32.mrf.mxu0
        %v638 = vadd.f32 0.0, %v637
        %v639 = vpop.f32.mrf.mxu0
        %v640 = vpop.f32.mrf.mxu0
        %v641 = vadd.f32 0.0, %v640
        %v642 = vpop.f32.mrf.mxu0
        %643 = vmatprep.mubr.bf16.mxu0 0
        %644 = vmatmul.mubr.bf16.gmra.mxu0 %v431
        %v645 = vpop.f32.mrf.mxu0
        %v646 = vadd.f32 0.0, %v645
        %v647 = vpop.f32.mrf.mxu0
        %v648 = vpop.f32.mrf.mxu0
        %v649 = vadd.f32 0.0, %v648
        %v650 = vpop.f32.mrf.mxu0
        %651 = vmatprep.mubr.bf16.mxu0 0
        %652 = vmatmul.mubr.bf16.gmra.mxu0 %v434
        %v653 = vpop.f32.mrf.mxu0
        %v654 = vadd.f32 0.0, %v653
        %v655 = vpop.f32.mrf.mxu0
        %v656 = vpop.f32.mrf.mxu0
        %v657 = vadd.f32 0.0, %v656
        %v658 = vpop.f32.mrf.mxu0
        %659 = vmatprep.mubr.bf16.mxu0 0
        %660 = vmatmul.mubr.bf16.gmra.mxu0 %v437
        %v661 = vpop.f32.mrf.mxu0
        %v662 = vadd.f32 0.0, %v661
        %v663 = vpop.f32.mrf.mxu0
        %v664 = vpop.f32.mrf.mxu0
        %v665 = vadd.f32 0.0, %v664
        %v666 = vpop.f32.mrf.mxu0
        %667 = vmatprep.mubr.bf16.mxu0 0
        %668 = vmatmul.mubr.bf16.gmra.mxu0 %v440
        %v669 = vpop.f32.mrf.mxu0
        %v670 = vadd.f32 0.0, %v669
        %v671 = vpop.f32.mrf.mxu0
        %v672 = vpop.f32.mrf.mxu0
        %v673 = vadd.f32 0.0, %v672
        %v674 = vpop.f32.mrf.mxu0
        %675 = vmatprep.mubr.bf16.mxu0 0
        %676 = vmatmul.mubr.bf16.gmra.mxu0 %v443
        %v677 = vpop.f32.mrf.mxu0
        %v678 = vadd.f32 0.0, %v677
        %v679 = vpop.f32.mrf.mxu0
        %v680 = vpop.f32.mrf.mxu0
        %v681 = vadd.f32 0.0, %v680
        %v682 = vpop.f32.mrf.mxu0
        %683 = vmatprep.mubr.bf16.mxu0 0
        %684 = vmatmul.mubr.bf16.gmra.mxu0 %v446
        %v685 = vpop.f32.mrf.mxu0
        %v686 = vadd.f32 0.0, %v685
        %v687 = vpop.f32.mrf.mxu0
        %v688 = vpop.f32.mrf.mxu0
        %v689 = vadd.f32 0.0, %v688
        %v690 = vpop.f32.mrf.mxu0
        %691 = vmatprep.mubr.bf16.mxu0 0
        %692 = vmatmul.mubr.bf16.gmra.mxu0 %v449
        %v693 = vpop.f32.mrf.mxu0
        %v694 = vadd.f32 0.0, %v693
        %v695 = vpop.f32.mrf.mxu0
        %v696 = vpop.f32.mrf.mxu0
        %v697 = vadd.f32 0.0, %v696
        %v698 = vpop.f32.mrf.mxu0
        %699 = vmatprep.mubr.bf16.mxu0 0
        %700 = vmatmul.mubr.bf16.gmra.mxu0 %v452
        %v701 = vpop.f32.mrf.mxu0
        %v702 = vadd.f32 0.0, %v701
        %v703 = vpop.f32.mrf.mxu0
        %v704 = vpop.f32.mrf.mxu0
        %v705 = vadd.f32 0.0, %v704
        %v706 = vpop.f32.mrf.mxu0
        %707 = vmatprep.mubr.bf16.mxu0 0
        %708 = vmatmul.mubr.bf16.gmra.mxu0 %v455
        %v709 = vpop.f32.mrf.mxu0
        %v710 = vadd.f32 0.0, %v709
        %v711 = vpop.f32.mrf.mxu0
        %v712 = vpop.f32.mrf.mxu0
        %v713 = vadd.f32 0.0, %v712
        %v714 = vpop.f32.mrf.mxu0
        %715 = vmatprep.mubr.bf16.mxu0 0
        %716 = vmatmul.mubr.bf16.gmra.mxu0 %v458
        %v717 = vpop.f32.mrf.mxu0
        %v718 = vadd.f32 0.0, %v717
        %v719 = vpop.f32.mrf.mxu0
        %v720 = vpop.f32.mrf.mxu0
        %v721 = vadd.f32 0.0, %v720
        %v722 = vpop.f32.mrf.mxu0
        %723 = vmatprep.mubr.bf16.mxu0 0
        %724 = vmatmul.mubr.bf16.gmra.mxu0 %v461
        %v725 = vpop.f32.mrf.mxu0
        %v726 = vadd.f32 0.0, %v725
        %v727 = vpop.f32.mrf.mxu0
        %v728 = vpop.f32.mrf.mxu0
        %v729 = vadd.f32 0.0, %v728
        %v730 = vpop.f32.mrf.mxu0
        %731 = vmatprep.mubr.bf16.mxu0 0
        %732 = vmatmul.mubr.bf16.gmra.mxu0 %v464
        %v733 = vpop.f32.mrf.mxu0
        %v734 = vadd.f32 0.0, %v733
        %v735 = vpop.f32.mrf.mxu0
        %v736 = vpop.f32.mrf.mxu0
        %v737 = vadd.f32 0.0, %v736
        %v738 = vpop.f32.mrf.mxu0
        %739 = vmatprep.mubr.bf16.mxu0 0
        %740 = vmatmul.mubr.bf16.gmra.mxu0 %v467
        %v741 = vpop.f32.mrf.mxu0
        %v742 = vadd.f32 0.0, %v741
        %v743 = vpop.f32.mrf.mxu0
        %v744 = vpop.f32.mrf.mxu0
        %v745 = vadd.f32 0.0, %v744
        %v746 = vpop.f32.mrf.mxu0
        %747 = vmatprep.mubr.bf16.mxu0 0
        %748 = vmatmul.mubr.bf16.gmra.mxu0 %v470
        %v749 = vpop.f32.mrf.mxu0
        %v750 = vadd.f32 0.0, %v749
        %v751 = vpop.f32.mrf.mxu0
        %v752 = vpop.f32.mrf.mxu0
        %v753 = vadd.f32 0.0, %v752
        %v754 = vpop.f32.mrf.mxu0
        %755 = vmatprep.mubr.bf16.mxu0 0
        %756 = vmatmul.mubr.bf16.gmra.mxu0 %v473
        %v757 = vpop.f32.mrf.mxu0
        %v758 = vadd.f32 0.0, %v757
        %v759 = vpop.f32.mrf.mxu0
        %v760 = vpop.f32.mrf.mxu0
        %v761 = vadd.f32 0.0, %v760
        %v762 = vpop.f32.mrf.mxu0
        %763 = vdwg.mxu0
        %v764 = vpack.c.bf16 %v513, %v510
        %v765 = vpack.c.bf16 %v521, %v518
        %v766 = vpack.c.bf16 %v529, %v526
        %v767 = vpack.c.bf16 %v537, %v534
        %v768 = vpack.c.bf16 %v545, %v542
        %v769 = vpack.c.bf16 %v553, %v550
        %v770 = vpack.c.bf16 %v561, %v558
        %v771 = vpack.c.bf16 %v569, %v566
        %v772 = vpack.c.bf16 %v577, %v574
        %v773 = vpack.c.bf16 %v585, %v582
        %v774 = vpack.c.bf16 %v593, %v590
        %v775 = vpack.c.bf16 %v601, %v598
        %v776 = vpack.c.bf16 %v609, %v606
        %v777 = vpack.c.bf16 %v617, %v614
        %v778 = vpack.c.bf16 %v625, %v622
        %v779 = vpack.c.bf16 %v633, %v630
        %v780 = vpack.c.bf16 %v641, %v638
        %v781 = vpack.c.bf16 %v649, %v646
        %v782 = vpack.c.bf16 %v657, %v654
        %v783 = vpack.c.bf16 %v665, %v662
        %v784 = vpack.c.bf16 %v673, %v670
        %v785 = vpack.c.bf16 %v681, %v678
        %v786 = vpack.c.bf16 %v689, %v686
        %v787 = vpack.c.bf16 %v697, %v694
        %v788 = vpack.c.bf16 %v705, %v702
        %v789 = vpack.c.bf16 %v713, %v710
        %v790 = vpack.c.bf16 %v721, %v718
        %v791 = vpack.c.bf16 %v729, %v726
        %v792 = vpack.c.bf16 %v737, %v734
        %v793 = vpack.c.bf16 %v745, %v742
        %v794 = vpack.c.bf16 %v753, %v750
        %v795 = vpack.c.bf16 %v761, %v758
        %v828 = vunpack.c.l.b16 %v764
        %v829 = vunpack.c.h.b16 %v764
        %v830 = vunpack.c.l.b16 %v765
        %v831 = vunpack.c.h.b16 %v765
        %v832 = vunpack.c.l.b16 %v766
        %v833 = vunpack.c.h.b16 %v766
        %v834 = vunpack.c.l.b16 %v767
        %v835 = vunpack.c.h.b16 %v767
        %v836 = vunpack.c.l.b16 %v768
        %v837 = vunpack.c.h.b16 %v768
        %v838 = vunpack.c.l.b16 %v769
        %v839 = vunpack.c.h.b16 %v769
        %v840 = vunpack.c.l.b16 %v770
        %v841 = vunpack.c.h.b16 %v770
        %v842 = vunpack.c.l.b16 %v771
        %v843 = vunpack.c.h.b16 %v771
        %v844 = vunpack.c.l.b16 %v772
        %v845 = vunpack.c.h.b16 %v772
        %v846 = vunpack.c.l.b16 %v773
        %v847 = vunpack.c.h.b16 %v773
        %v848 = vunpack.c.l.b16 %v774
        %v849 = vunpack.c.h.b16 %v774
        %v850 = vunpack.c.l.b16 %v775
        %v851 = vunpack.c.h.b16 %v775
        %v852 = vunpack.c.l.b16 %v776
        %v853 = vunpack.c.h.b16 %v776
        %v854 = vunpack.c.l.b16 %v777
        %v855 = vunpack.c.h.b16 %v777
        %v856 = vunpack.c.l.b16 %v778
        %v857 = vunpack.c.h.b16 %v778
        %v858 = vunpack.c.l.b16 %v779
        %v859 = vunpack.c.h.b16 %v779
        %v860 = vunpack.c.l.b16 %v780
        %v861 = vunpack.c.h.b16 %v780
        %v862 = vunpack.c.l.b16 %v781
        %v863 = vunpack.c.h.b16 %v781
        %v864 = vunpack.c.l.b16 %v782
        %v865 = vunpack.c.h.b16 %v782
        %v866 = vunpack.c.l.b16 %v783
        %v867 = vunpack.c.h.b16 %v783
        %v868 = vunpack.c.l.b16 %v784
        %v869 = vunpack.c.h.b16 %v784
        %v870 = vunpack.c.l.b16 %v785
        %v871 = vunpack.c.h.b16 %v785
        %v872 = vunpack.c.l.b16 %v786
        %v873 = vunpack.c.h.b16 %v786
        %v874 = vunpack.c.l.b16 %v787
        %v875 = vunpack.c.h.b16 %v787
        %v876 = vunpack.c.l.b16 %v788
        %v877 = vunpack.c.h.b16 %v788
        %v878 = vunpack.c.l.b16 %v789
        %v879 = vunpack.c.h.b16 %v789
        %v880 = vunpack.c.l.b16 %v790
        %v881 = vunpack.c.h.b16 %v790
        %v882 = vunpack.c.l.b16 %v791
        %v883 = vunpack.c.h.b16 %v791
        %v884 = vunpack.c.l.b16 %v792
        %v885 = vunpack.c.h.b16 %v792
        %v886 = vunpack.c.l.b16 %v793
        %v887 = vunpack.c.h.b16 %v793
        %v888 = vunpack.c.l.b16 %v794
        %v889 = vunpack.c.h.b16 %v794
        %v890 = vunpack.c.l.b16 %v795
        %v891 = vunpack.c.h.b16 %v795
        %v892 = vpack.c.b16 %v828, %v828
        %v893 = vpack.c.b16 %v829, %v829
        %v894 = vpack.c.b16 %v830, %v830
        %v895 = vpack.c.b16 %v831, %v831
        %v896 = vpack.c.b16 %v832, %v832
        %v897 = vpack.c.b16 %v833, %v833
        %v898 = vpack.c.b16 %v834, %v834
        %v899 = vpack.c.b16 %v835, %v835
        %v900 = vpack.c.b16 %v836, %v836
        %v901 = vpack.c.b16 %v837, %v837
        %v902 = vpack.c.b16 %v838, %v838
        %v903 = vpack.c.b16 %v839, %v839
        %v904 = vpack.c.b16 %v840, %v840
        %v905 = vpack.c.b16 %v841, %v841
        %v906 = vpack.c.b16 %v842, %v842
        %v907 = vpack.c.b16 %v843, %v843
        %v908 = vpack.c.b16 %v844, %v844
        %v909 = vpack.c.b16 %v845, %v845
        %v910 = vpack.c.b16 %v846, %v846
        %v911 = vpack.c.b16 %v847, %v847
        %v912 = vpack.c.b16 %v848, %v848
        %v913 = vpack.c.b16 %v849, %v849
        %v914 = vpack.c.b16 %v850, %v850
        %v915 = vpack.c.b16 %v851, %v851
        %v916 = vpack.c.b16 %v852, %v852
        %v917 = vpack.c.b16 %v853, %v853
        %v918 = vpack.c.b16 %v854, %v854
        %v919 = vpack.c.b16 %v855, %v855
        %v920 = vpack.c.b16 %v856, %v856
        %v921 = vpack.c.b16 %v857, %v857
        %v922 = vpack.c.b16 %v858, %v858
        %v923 = vpack.c.b16 %v859, %v859
        %v924 = vpack.c.b16 %v860, %v860
        %v925 = vpack.c.b16 %v861, %v861
        %v926 = vpack.c.b16 %v862, %v862
        %v927 = vpack.c.b16 %v863, %v863
        %v928 = vpack.c.b16 %v864, %v864
        %v929 = vpack.c.b16 %v865, %v865
        %v930 = vpack.c.b16 %v866, %v866
        %v931 = vpack.c.b16 %v867, %v867
        %v932 = vpack.c.b16 %v868, %v868
        %v933 = vpack.c.b16 %v869, %v869
        %v934 = vpack.c.b16 %v870, %v870
        %v935 = vpack.c.b16 %v871, %v871
        %v936 = vpack.c.b16 %v872, %v872
        %v937 = vpack.c.b16 %v873, %v873
        %v938 = vpack.c.b16 %v874, %v874
        %v939 = vpack.c.b16 %v875, %v875
        %v940 = vpack.c.b16 %v876, %v876
        %v941 = vpack.c.b16 %v877, %v877
        %v942 = vpack.c.b16 %v878, %v878
        %v943 = vpack.c.b16 %v879, %v879
        %v944 = vpack.c.b16 %v880, %v880
        %v945 = vpack.c.b16 %v881, %v881
        %v946 = vpack.c.b16 %v882, %v882
        %v947 = vpack.c.b16 %v883, %v883
        %v948 = vpack.c.b16 %v884, %v884
        %v949 = vpack.c.b16 %v885, %v885
        %v950 = vpack.c.b16 %v886, %v886
        %v951 = vpack.c.b16 %v887, %v887
        %v952 = vpack.c.b16 %v888, %v888
        %v953 = vpack.c.b16 %v889, %v889
        %v954 = vpack.c.b16 %v890, %v890
        %v955 = vpack.c.b16 %v891, %v891
        %1020 = vst [vmem:[%s137] sm:$0xf] %v892
        %1021 = vst [vmem:[%s137 + $0x4] sm:$0xf] %v893
        %1022 = vst [vmem:[%s137 + $0x8] sm:$0xf] %v894
        %1023 = vst [vmem:[%s137 + $0xc] sm:$0xf] %v895
        %1024 = vst [vmem:[%s137 + $0x10] sm:$0xf] %v896
        %1025 = vst [vmem:[%s137 + $0x14] sm:$0xf] %v897
        %1026 = vst [vmem:[%s137 + $0x18] sm:$0xf] %v898
        %1027 = vst [vmem:[%s137 + $0x1c] sm:$0xf] %v899
        %1028 = vst [vmem:[%s137 + $0x20] sm:$0xf] %v900
        %1029 = vst [vmem:[%s137 + $0x24] sm:$0xf] %v901
        %1030 = vst [vmem:[%s137 + $0x28] sm:$0xf] %v902
        %1031 = vst [vmem:[%s137 + $0x2c] sm:$0xf] %v903
        %1032 = vst [vmem:[%s137 + $0x30] sm:$0xf] %v904
        %1033 = vst [vmem:[%s137 + $0x34] sm:$0xf] %v905
        %1034 = vst [vmem:[%s137 + $0x38] sm:$0xf] %v906
        %1035 = vst [vmem:[%s137 + $0x3c] sm:$0xf] %v907
        %1036 = vst [vmem:[%s137 + $0x40] sm:$0xf] %v908
        %1037 = vst [vmem:[%s137 + $0x44] sm:$0xf] %v909
        %1038 = vst [vmem:[%s137 + $0x48] sm:$0xf] %v910
        %1039 = vst [vmem:[%s137 + $0x4c] sm:$0xf] %v911
        %1040 = vst [vmem:[%s137 + $0x50] sm:$0xf] %v912
        %1041 = vst [vmem:[%s137 + $0x54] sm:$0xf] %v913
        %1042 = vst [vmem:[%s137 + $0x58] sm:$0xf] %v914
        %1043 = vst [vmem:[%s137 + $0x5c] sm:$0xf] %v915
        %1044 = vst [vmem:[%s137 + $0x60] sm:$0xf] %v916
        %1045 = vst [vmem:[%s137 + $0x64] sm:$0xf] %v917
        %1046 = vst [vmem:[%s137 + $0x68] sm:$0xf] %v918
        %1047 = vst [vmem:[%s137 + $0x6c] sm:$0xf] %v919
        %1048 = vst [vmem:[%s137 + $0x70] sm:$0xf] %v920
        %1049 = vst [vmem:[%s137 + $0x74] sm:$0xf] %v921
        %1050 = vst [vmem:[%s137 + $0x78] sm:$0xf] %v922
        %1051 = vst [vmem:[%s137 + $0x7c] sm:$0xf] %v923
        %1052 = vst [vmem:[%s137 + $0x80] sm:$0xf] %v924
        %1053 = vst [vmem:[%s137 + $0x84] sm:$0xf] %v925
        %1054 = vst [vmem:[%s137 + $0x88] sm:$0xf] %v926
        %1055 = vst [vmem:[%s137 + $0x8c] sm:$0xf] %v927
        %1056 = vst [vmem:[%s137 + $0x90] sm:$0xf] %v928
        %1057 = vst [vmem:[%s137 + $0x94] sm:$0xf] %v929
        %1058 = vst [vmem:[%s137 + $0x98] sm:$0xf] %v930
        %1059 = vst [vmem:[%s137 + $0x9c] sm:$0xf] %v931
        %1060 = vst [vmem:[%s137 + $0xa0] sm:$0xf] %v932
        %1061 = vst [vmem:[%s137 + $0xa4] sm:$0xf] %v933
        %1062 = vst [vmem:[%s137 + $0xa8] sm:$0xf] %v934
        %1063 = vst [vmem:[%s137 + $0xac] sm:$0xf] %v935
        %1064 = vst [vmem:[%s137 + $0xb0] sm:$0xf] %v936
        %1065 = vst [vmem:[%s137 + $0xb4] sm:$0xf] %v937
        %1066 = vst [vmem:[%s137 + $0xb8] sm:$0xf] %v938
        %1067 = vst [vmem:[%s137 + $0xbc] sm:$0xf] %v939
        %1068 = vst [vmem:[%s137 + $0xc0] sm:$0xf] %v940
        %1069 = vst [vmem:[%s137 + $0xc4] sm:$0xf] %v941
        %1070 = vst [vmem:[%s137 + $0xc8] sm:$0xf] %v942
        %1071 = vst [vmem:[%s137 + $0xcc] sm:$0xf] %v943
        %1072 = vst [vmem:[%s137 + $0xd0] sm:$0xf] %v944
        %1073 = vst [vmem:[%s137 + $0xd4] sm:$0xf] %v945
        %1074 = vst [vmem:[%s137 + $0xd8] sm:$0xf] %v946
        %1075 = vst [vmem:[%s137 + $0xdc] sm:$0xf] %v947
        %1076 = vst [vmem:[%s137 + $0xe0] sm:$0xf] %v948
        %1077 = vst [vmem:[%s137 + $0xe4] sm:$0xf] %v949
        %1078 = vst [vmem:[%s137 + $0xe8] sm:$0xf] %v950
        %1079 = vst [vmem:[%s137 + $0xec] sm:$0xf] %v951
        %1080 = vst [vmem:[%s137 + $0xf0] sm:$0xf] %v952
        %1081 = vst [vmem:[%s137 + $0xf4] sm:$0xf] %v953
        %1082 = vst [vmem:[%s137 + $0xf8] sm:$0xf] %v954
        %1083 = vst [vmem:[%s137 + $0xfc] sm:$0xf] %v955
        %s1084 = sand.u32 %s71, 1
        %s1085 = scalar_lea.sflag [#allocation3], %s1084
        %s1086 = sand.u32 %s71, 1
        %s1087 = smul.addr %s1086, 256
        %s1088 = scalar_lea.vmem [#allocation2], %s1087
        // Predicated region
        $region29: #{tpu_custom_call.1} parent=27 // pred_check
          %p1089 = pneg %p81
        $region30: #{tpu_custom_call.1} parent=27 // pred_check_branch
          %1091 = sbr.rel (%p1089) target = $region32
        $region31: #{tpu_custom_call.1} parent=27 // pred_region
          %s1092 = smul.u32 64, %s16
          %s1094 = ssub.s32 4096, 4096
          %1095 = vsyncadd %s1085, %s1094
          %s1096 = smul.addr %s1092, 64
          %s1097 = scalar_lea.hbm %s2, %s1096
          %s1098 = sshll.u32 %s1088, 4
          %s1099 = int_to_ptr.vmem [resolvable:$true] %s1098
          %1104 = dma.vmem_to_hbm [thread:$0]  %s1099, 4096, %s1097, %s1085, 64, 64, 4
        $region32: #{tpu_custom_call.1} parent=27 // pred_fallthru
          _
      $region28: #{tpu_custom_call.1} parent=5 // pred_fallthru
        _
      %p1105 = scmp.le.s32.totalorder 2, %s11
      // Predicated region
      $region33: #{tpu_custom_call.1} parent=5 // pred_check
        %p1106 = pneg %p1105
      $region34: #{tpu_custom_call.1} parent=5 // pred_check_branch
        %1108 = sbr.rel (%p1106) target = $region36
      $region35: #{tpu_custom_call.1} parent=5 // pred_region
        %s1109 = ssub.s32 %s11, 2
        // Predicated region
        $region37: #{tpu_custom_call.1} parent=35 // pred_check
          %p1110 = pneg %p87
        $region38: #{tpu_custom_call.1} parent=35 // pred_check_branch
          %1112 = sbr.rel (%p1110) target = $region40
        $region39: #{tpu_custom_call.1} parent=35 // pred_region
          %s1113 = sand.u32 %s72, 1
          %s1114 = scalar_lea.sflag [#allocation3], %s1113
          %s1115 = sand.u32 %s72, 1
          %s1116 = smul.addr %s1115, 256
          %s1117 = scalar_lea.vmem [#allocation2], %s1116
          %1118 = dma.done %s1114, 4096
        $region40: #{tpu_custom_call.1} parent=35 // pred_fallthru
          _
      $region36: #{tpu_custom_call.1} parent=5 // pred_fallthru
        _
    $region6: #{tpu_custom_call.1} parent=1 // loop_footer
      %s15 = sadd.s32 1, %s11
    $region7: #{tpu_custom_call.1} parent=1 // loop_footer_branch
      %10 = sbr.rel target = $region3
    $region8: #{tpu_custom_call.1} parent=1 // loop_exit
      _
    %1119 = vsyncpa [#allocation3], 1
    %s1120 = scalar_lea.sflag [#allocation3], 1
    %1121 = vsyncpa %s1120, 1

</llo_original>
